<compile_context>
chip_gen: v6e
topology: v6e:2x2x1
jax: 0.10.0
libtpu: 0.0.40
codegen_flags: <defaults>
</compile_context>

<pallas_src>
import functools

import numpy as np

import jax
import jax.numpy as jnp
from jax.experimental import pallas as pl
from jax.experimental.pallas import tpu as pltpu

BN_EPS = 1e-5


# ---------------------------------------------------------------------------
# Fused Pallas kernel (one grid step == one group / folded batch element):
#   conv1+bn1+relu -> nums x (dilated 3x3 conv + bn + relu) -> conv3 + bn3
# ---------------------------------------------------------------------------
def _bottle2neck_kernel(x_ref, w1_ref, bn1_ref, w2_ref, mask_ref, bn2_ref,
                        w3_ref, bn3_ref, o_ref, *, scale, nums, hp, hw,
                        shifts, full_valid):
    inv_hw = 1.0 / hw

    def bn(h, gb):
        # training-mode BatchNorm2d (N == 1): per-channel stats over H*W, biased
        # variance, one-pass sums; mean folded into the bias (saves a VPU pass).
        mean = jnp.sum(h, axis=1, keepdims=True) * inv_hw
        ex2 = jnp.sum(h * h, axis=1, keepdims=True) * inv_hw
        var = jnp.maximum(ex2 - mean * mean, 0.0)       # cancellation guard
        s = gb[:, 0:1] * jax.lax.rsqrt(var + BN_EPS)    # gamma / sqrt(var + eps)
        b = gb[:, 1:2] - mean * s                       # beta - mean * s
        return h * s + b

    x = x_ref[0]                                                  # (inplanes, HW)

    # conv1 (grouped 1x1, bias=False) + bn1 + relu
    h1 = jnp.dot(w1_ref[0], x, preferred_element_type=jnp.float32)  # (scale*hp, HW)
    h1 = jnp.maximum(bn(h1, bn1_ref[0]), 0.0)
    # per-group rows of h1 are ordered m = s*hp + h, so spx[s] == h1[s*hp:(s+1)*hp]

    masks = mask_ref[...]                                         # (9, HW), static 0/1

    pieces = []
    sp = None
    for i in range(nums):
        cur = h1[i * hp:(i + 1) * hp, :]
        sp = cur if i == 0 else sp + cur
        # dilated 3x3 grouped conv: the 9 taps are produced by XLU lane-rolls of
        # the flat (hp, HW) activation plus static boundary masks (in-kernel
        # im2col), then fused into ONE MXU matmul with K = 9*hp.
        # Conv bias dropped: it cancels under the following training-mode BN.
        taps = []
        for t in range(9):
            rolled = sp if shifts[t] == 0 else pltpu.roll(sp, shifts[t], 1)
            taps.append(rolled if full_valid[t] else rolled * masks[t:t + 1, :])
        taps = jnp.concatenate(taps, axis=0)                      # (9*hp, HW)
        conv = jnp.dot(w2_ref[0, i], taps, preferred_element_type=jnp.float32)
        sp = jnp.maximum(bn(conv, bn2_ref[0, i]), 0.0)
        pieces.append(sp)
    if scale != 1:
        pieces.append(h1[nums * hp:(nums + 1) * hp, :])

    # conv3 (grouped 1x1, bias=False): single dot with K = scale*hp (no per-piece loop).
    cat = pieces[0] if len(pieces) == 1 else jnp.concatenate(pieces, axis=0)
    out = jnp.dot(w3_ref[0], cat, preferred_element_type=jnp.float32)  # (planes, HW)
    o_ref[0] = bn(out, bn3_ref[0]).astype(o_ref.dtype)


# ---------------------------------------------------------------------------
# Trace-time constants: roll shifts + boundary masks for the 9 dilated taps
# (numpy, cached -> built once, no per-call XLA glue).
# ---------------------------------------------------------------------------
@functools.lru_cache(maxsize=None)
def _dilated_taps(H, W, K=3, D=2, P=2):
    HW = H * W
    yy = np.arange(H)[:, None]
    xx = np.arange(W)[None, :]
    shifts, masks, full = [], [], []
    for kh in range(K):
        for kw in range(K):
            oy, ox = kh * D - P, kw * D - P
            # tap[p] = sp[p + oy*W + ox] when in-bounds -> roll by (-(oy*W+ox)) mod HW,
            # then zero out-of-bounds / wrapped positions with a static mask.
            shifts.append(int((-(oy * W + ox)) % HW))
            valid = (yy + oy >= 0) & (yy + oy < H) & (xx + ox >= 0) & (xx + ox < W)
            masks.append(valid.reshape(HW).astype(np.float32))
            full.append(bool(valid.all()))
    return tuple(shifts), np.stack(masks, axis=0), tuple(full)


# ---------------------------------------------------------------------------
# Wrapper-side packing (now just cheap transposes / concats of small arrays).
# ---------------------------------------------------------------------------
def _pack_params(params, B, hp, scale, planes, nums):
    w1 = params["conv1_w"]                                            # (B, hp*scale, inplanes)
    bn1 = jnp.concatenate([params["bn1_g"], params["bn1_b"]], axis=2)  # (B, hp*scale, 2)
    # conv2: (B, hp_out, hp_in, 3, 3) -> (B, hp_out, 9*hp_in) with col = t*hp + c_in
    w2 = jnp.stack(
        [jnp.transpose(params["conv2_w"][i], (0, 1, 3, 4, 2)).reshape(B, hp, 9 * hp)
         for i in range(nums)], axis=1)                               # (B, nums, hp, 9*hp)
    bn2 = jnp.stack(
        [jnp.concatenate([params["bn2_g"][i], params["bn2_b"][i]], axis=2)
         for i in range(nums)], axis=1)                               # (B, nums, hp, 2)
    w3 = params["conv3_w"]                                            # (B, planes, hp*scale)
    bn3 = jnp.concatenate([params["bn3_g"], params["bn3_b"]], axis=2)  # (B, planes, 2)
    return w1, bn1, w2, bn2, w3, bn3


# ---------------------------------------------------------------------------
# Forward
# ---------------------------------------------------------------------------
@functools.partial(jax.jit,
                   static_argnames=("batch_size", "scale", "hidden_planes", "planes"))
def bottle2neck_forward(x, params, *, batch_size, scale, hidden_planes, planes):
    """x: NCHW (1, inplanes*batch_size, H, W) -> (1, planes*batch_size, H, W)."""
    B, hp = batch_size, hidden_planes
    _, ctot, H, W = x.shape
    inplanes = ctot // B
    HW = H * W
    nums = 1 if scale == 1 else scale - 1

    shifts, masks_np, full_valid = _dilated_taps(H, W, K=3, D=2, P=2)
    masks = jnp.asarray(masks_np)                                     # (9, HW) constant

    # torch channel c = b*inplanes + j is group-major already.
    x_g = x.reshape(B, inplanes, HW).astype(jnp.float32)
    w1, bn1, w2, bn2, w3, bn3 = _pack_params(params, B, hp, scale, planes, nums)

    kern = functools.partial(_bottle2neck_kernel, scale=scale, nums=nums, hp=hp,
                             hw=HW, shifts=shifts, full_valid=full_valid)

    out = pl.pallas_call(
        kern,
        out_shape=jax.ShapeDtypeStruct((B, planes, HW), jnp.float32),
        grid=(B,),
        in_specs=[
            pl.BlockSpec((1, inplanes, HW), lambda b: (b, 0, 0)),          # x
            pl.BlockSpec((1, hp * scale, inplanes), lambda b: (b, 0, 0)),  # w1
            pl.BlockSpec((1, hp * scale, 2), lambda b: (b, 0, 0)),         # bn1
            pl.BlockSpec((1, nums, hp, 9 * hp), lambda b: (b, 0, 0, 0)),   # w2
            pl.BlockSpec((9, HW), lambda b: (0, 0)),                       # tap masks
            pl.BlockSpec((1, nums, hp, 2), lambda b: (b, 0, 0, 0)),        # bn2
            pl.BlockSpec((1, planes, hp * scale), lambda b: (b, 0, 0)),    # w3
            pl.BlockSpec((1, planes, 2), lambda b: (b, 0, 0)),             # bn3
        ],
        out_specs=pl.BlockSpec((1, planes, HW), lambda b: (b, 0, 0)),
        compiler_params=pltpu.CompilerParams(
            dimension_semantics=("parallel",)),       # shard groups across TCs on v7x
    )(x_g, w1, bn1, w2, masks, bn2, w3, bn3)

    # torch output channel = b*planes + p == row order of `out`
    return out.reshape(1, B * planes, H, W)


# ---------------------------------------------------------------------------
# Pure-JAX reference (group-major per-group matmuls + explicit im2col), used only
# for an in-script correctness check against the fused Pallas kernel.
# ---------------------------------------------------------------------------
def _bn_ref(h, gamma, beta):
    mean = jnp.mean(h, axis=2, keepdims=True)
    var = jnp.mean(jnp.square(h - mean), axis=2, keepdims=True)
    return (h - mean) * jax.lax.rsqrt(var + BN_EPS) * gamma + beta


def _dilated_patches(sp, H, W, K=3, D=2, P=2):
    G, C, _ = sp.shape
    xp = jnp.pad(sp.reshape(G, C, H, W), ((0, 0), (0, 0), (P, P), (P, P)))
    taps = [xp[:, :, kh * D:kh * D + H, kw * D:kw * D + W]
            for kh in range(K) for kw in range(K)]
    return jnp.stack(taps, axis=2).reshape(G, C * K * K, H * W)


def bottle2neck_reference(x, params, *, batch_size, scale, hidden_planes, planes):
    B, hp = batch_size, hidden_planes
    _, ctot, H, W = x.shape
    inplanes = ctot // B
    HW = H * W
    nums = 1 if scale == 1 else scale - 1
    hi = jax.lax.Precision.HIGHEST

    xg = x.reshape(B, inplanes, HW).astype(jnp.float32)
    out1 = jnp.einsum('boi,bis->bos', params["conv1_w"], xg, precision=hi)
    out1 = jnp.maximum(_bn_ref(out1, params["bn1_g"], params["bn1_b"]), 0.0)
    out1 = out1.reshape(B, scale, hp, HW)
    spx = [out1[:, s] for s in range(scale)]

    pieces, sp = [], None
    for i in range(nums):
        sp = spx[i] if i == 0 else sp + spx[i]
        patches = _dilated_patches(sp, H, W)
        w = params["conv2_w"][i].reshape(B, hp, hp * 9)
        conv = jnp.einsum('bok,bks->bos', w, patches, precision=hi) + params["conv2_b"][i]
        sp = jnp.maximum(_bn_ref(conv, params["bn2_g"][i], params["bn2_b"][i]), 0.0)
        pieces.append(sp)
    if scale != 1:
        pieces.append(spx[nums])
    cat = jnp.stack(pieces, axis=1).reshape(B, scale * hp, HW)
    out3 = jnp.einsum('boi,bis->bos', params["conv3_w"], cat, precision=hi)
    out3 = _bn_ref(out3, params["bn3_g"], params["bn3_b"])
    return out3.reshape(1, B * planes, H, W)


# ---------------------------------------------------------------------------
# Parameter init (group-major layout, equivalent to the grouped torch weights)
# ---------------------------------------------------------------------------
def init_params(key, *, batch_size, inplanes, planes, hidden_planes, scale):
    B, hp = batch_size, hidden_planes
    nums = 1 if scale == 1 else scale - 1
    ks = iter(jax.random.split(key, 8 + 6 * nums))

    def nrm(shape, s=0.2):
        return s * jax.random.normal(next(ks), shape, jnp.float32)

    params = {
        # conv1: torch (hp*B*scale, inplanes, 1, 1), groups=B -> (B, hp*scale, inplanes)
        "conv1_w": nrm((B, hp * scale, inplanes)),
        "bn1_g": 1.0 + nrm((B, hp * scale, 1)),
        "bn1_b": nrm((B, hp * scale, 1)),
        "conv2_w": [], "conv2_b": [], "bn2_g": [], "bn2_b": [],
        # conv3: torch (planes*B, hp*scale, 1, 1), groups=B -> (B, planes, hp*scale)
        "conv3_w": nrm((B, planes, hp * scale)),
        "bn3_g": 1.0 + nrm((B, planes, 1)),
        "bn3_b": nrm((B, planes, 1)),
    }
    for _ in range(nums):
        # torch (hp*B, hp, 3, 3), groups=B -> (B, hp, hp, 3, 3)
        params["conv2_w"].append(nrm((B, hp, hp, 3, 3)))
        params["conv2_b"].append(nrm((B, hp, 1)))   # reference only (cancels in BN)
        params["bn2_g"].append(1.0 + nrm((B, hp, 1)))
        params["bn2_b"].append(nrm((B, hp, 1)))
    return params


if __name__ == "__main__":
    batch_size = 2
    inplanes = 4
    planes = 4
    hidden_planes = 4
    scale = 2
    H = W = 16

    key = jax.random.PRNGKey(0)
    kx, kp = jax.random.split(key)
    x = jax.random.normal(kx, (1, inplanes * batch_size, H, W), jnp.float32)
    params = init_params(kp, batch_size=batch_size, inplanes=inplanes,
                         planes=planes, hidden_planes=hidden_planes, scale=scale)

    out = bottle2neck_forward(x, params, batch_size=batch_size, scale=scale,
                              hidden_planes=hidden_planes, planes=planes)
    out = jax.block_until_ready(out)

    ref = bottle2neck_reference(x, params, batch_size=batch_size, scale=scale,
                                hidden_planes=hidden_planes, planes=planes)
    ref = jax.block_until_ready(ref)

    assert out.shape == (1, planes * batch_size, H, W), out.shape
    assert bool(jnp.all(jnp.isfinite(out)))
    max_err = float(jnp.max(jnp.abs(out - ref)))
    assert max_err < 1e-2, f"mismatch vs reference: {max_err}"
    print("KERNEL_OK")
</pallas_src>

<mosaic_0001>
module attributes {stable_mosaic.version = 11 : i64} {
  func.func @_bottle2neck_kernel(%arg0: i32, %arg1: memref<1x4x256xf32, #tpu.memory_space<vmem>>, %arg2: memref<1x8x4xf32, #tpu.memory_space<vmem>>, %arg3: memref<1x8x2xf32, #tpu.memory_space<vmem>>, %arg4: memref<1x1x4x36xf32, #tpu.memory_space<vmem>>, %arg5: memref<9x256xf32, #tpu.memory_space<vmem>>, %arg6: memref<1x1x4x2xf32, #tpu.memory_space<vmem>>, %arg7: memref<1x4x8xf32, #tpu.memory_space<vmem>>, %arg8: memref<1x4x2xf32, #tpu.memory_space<vmem>>, %arg9: memref<1x4x256xf32, #tpu.memory_space<vmem>>) attributes {dimension_semantics = [#tpu.dimension_semantics<parallel>], iteration_bounds = array<i64: 2>, scalar_prefetch = 0 : i64, scratch_operands = 0 : i64, tpu.core_type = #tpu.core_type<tc>, window_params = [{transform_indices = @transform_0, window_bounds = array<i64: 1, 4, 256>}, {transform_indices = @transform_1, window_bounds = array<i64: 1, 8, 4>}, {transform_indices = @transform_2, window_bounds = array<i64: 1, 8, 2>}, {transform_indices = @transform_3, window_bounds = array<i64: 1, 1, 4, 36>}, {pipeline_mode = #tpu.pipeline_mode<synchronous>, transform_indices = @transform_4, window_bounds = array<i64: 9, 256>}, {transform_indices = @transform_5, window_bounds = array<i64: 1, 1, 4, 2>}, {transform_indices = @transform_6, window_bounds = array<i64: 1, 4, 8>}, {transform_indices = @transform_7, window_bounds = array<i64: 1, 4, 2>}, {transform_indices = @transform_8, window_bounds = array<i64: 1, 4, 256>}]} {
    %c0 = arith.constant 0 : index
    %c0_0 = arith.constant 0 : index
    %c0_1 = arith.constant 0 : index
    %0 = vector.load %arg1[%c0, %c0_0, %c0_1] : memref<1x4x256xf32, #tpu.memory_space<vmem>>, vector<1x4x256xf32>
    %1 = vector.shape_cast %0 : vector<1x4x256xf32> to vector<4x256xf32>
    %c0_2 = arith.constant 0 : index
    %c0_3 = arith.constant 0 : index
    %c0_4 = arith.constant 0 : index
    %2 = vector.load %arg2[%c0_2, %c0_3, %c0_4] : memref<1x8x4xf32, #tpu.memory_space<vmem>>, vector<1x8x4xf32>
    %3 = vector.shape_cast %2 : vector<1x8x4xf32> to vector<8x4xf32>
    %cst = arith.constant dense<0.000000e+00> : vector<8x256xf32>
    %4 = tpu.matmul %3, %1, %cst {dimension_numbers = #tpu.dot_dimension_numbers<[1], [0], [0], [1], [0, 0, 1, 1], [], []>} : vector<8x4xf32>, vector<4x256xf32>, vector<8x256xf32> -> vector<8x256xf32>
    %c0_5 = arith.constant 0 : index
    %c0_6 = arith.constant 0 : index
    %c0_7 = arith.constant 0 : index
    %5 = vector.load %arg3[%c0_5, %c0_6, %c0_7] : memref<1x8x2xf32, #tpu.memory_space<vmem>>, vector<1x8x2xf32>
    %6 = vector.shape_cast %5 : vector<1x8x2xf32> to vector<8x2xf32>
    %cst_8 = arith.constant dense<0.000000e+00> : vector<8xf32>
    %7 = vector.multi_reduction <add>, %4, %cst_8 [1] : vector<8x256xf32> to vector<8xf32>
    %8 = vector.shape_cast %7 : vector<8xf32> to vector<8x1xf32>
    %cst_9 = arith.constant 3.906250e-03 : f32
    %9 = vector.broadcast %cst_9 : f32 to vector<8x1xf32>
    %10 = arith.mulf %8, %9 : vector<8x1xf32>
    %11 = arith.mulf %4, %4 : vector<8x256xf32>
    %cst_10 = arith.constant dense<0.000000e+00> : vector<8xf32>
    %12 = vector.multi_reduction <add>, %11, %cst_10 [1] : vector<8x256xf32> to vector<8xf32>
    %13 = vector.shape_cast %12 : vector<8xf32> to vector<8x1xf32>
    %cst_11 = arith.constant 3.906250e-03 : f32
    %14 = vector.broadcast %cst_11 : f32 to vector<8x1xf32>
    %15 = arith.mulf %13, %14 : vector<8x1xf32>
    %16 = arith.mulf %10, %10 : vector<8x1xf32>
    %17 = arith.subf %15, %16 : vector<8x1xf32>
    %cst_12 = arith.constant 0.000000e+00 : f32
    %18 = vector.broadcast %cst_12 : f32 to vector<8x1xf32>
    %19 = arith.maximumf %17, %18 : vector<8x1xf32>
    %20 = vector.extract_strided_slice %6 {offsets = [0, 0], sizes = [8, 1], strides = [1, 1]} : vector<8x2xf32> to vector<8x1xf32>
    %cst_13 = arith.constant 9.99999974E-6 : f32
    %21 = vector.broadcast %cst_13 : f32 to vector<8x1xf32>
    %22 = arith.addf %19, %21 : vector<8x1xf32>
    %23 = math.rsqrt %22 : vector<8x1xf32>
    %24 = arith.mulf %20, %23 : vector<8x1xf32>
    %25 = vector.extract_strided_slice %6 {offsets = [0, 1], sizes = [8, 1], strides = [1, 1]} : vector<8x2xf32> to vector<8x1xf32>
    %26 = arith.mulf %10, %24 : vector<8x1xf32>
    %27 = arith.subf %25, %26 : vector<8x1xf32>
    %28 = vector.broadcast %24 : vector<8x1xf32> to vector<8x256xf32>
    %29 = arith.mulf %4, %28 : vector<8x256xf32>
    %30 = vector.broadcast %27 : vector<8x1xf32> to vector<8x256xf32>
    %31 = arith.addf %29, %30 : vector<8x256xf32>
    %cst_14 = arith.constant 0.000000e+00 : f32
    %32 = vector.broadcast %cst_14 : f32 to vector<8x256xf32>
    %33 = arith.maximumf %31, %32 : vector<8x256xf32>
    %c0_15 = arith.constant 0 : index
    %c0_16 = arith.constant 0 : index
    %34 = vector.load %arg5[%c0_15, %c0_16] : memref<9x256xf32, #tpu.memory_space<vmem>>, vector<9x256xf32>
    %35 = vector.extract_strided_slice %33 {offsets = [0, 0], sizes = [4, 256], strides = [1, 1]} : vector<8x256xf32> to vector<4x256xf32>
    %c34_i32 = arith.constant 34 : i32
    %36 = tpu.dynamic_rotate %35 by %c34_i32 dim 1 : vector<4x256xf32>, i32 -> vector<4x256xf32>
    %37 = vector.extract_strided_slice %34 {offsets = [0, 0], sizes = [1, 256], strides = [1, 1]} : vector<9x256xf32> to vector<1x256xf32>
    %38 = vector.broadcast %37 : vector<1x256xf32> to vector<4x256xf32>
    %39 = arith.mulf %36, %38 : vector<4x256xf32>
    %c32_i32 = arith.constant 32 : i32
    %40 = tpu.dynamic_rotate %35 by %c32_i32 dim 1 : vector<4x256xf32>, i32 -> vector<4x256xf32>
    %41 = vector.extract_strided_slice %34 {offsets = [1, 0], sizes = [1, 256], strides = [1, 1]} : vector<9x256xf32> to vector<1x256xf32>
    %42 = vector.broadcast %41 : vector<1x256xf32> to vector<4x256xf32>
    %43 = arith.mulf %40, %42 : vector<4x256xf32>
    %c30_i32 = arith.constant 30 : i32
    %44 = tpu.dynamic_rotate %35 by %c30_i32 dim 1 : vector<4x256xf32>, i32 -> vector<4x256xf32>
    %45 = vector.extract_strided_slice %34 {offsets = [2, 0], sizes = [1, 256], strides = [1, 1]} : vector<9x256xf32> to vector<1x256xf32>
    %46 = vector.broadcast %45 : vector<1x256xf32> to vector<4x256xf32>
    %47 = arith.mulf %44, %46 : vector<4x256xf32>
    %c2_i32 = arith.constant 2 : i32
    %48 = tpu.dynamic_rotate %35 by %c2_i32 dim 1 : vector<4x256xf32>, i32 -> vector<4x256xf32>
    %49 = vector.extract_strided_slice %34 {offsets = [3, 0], sizes = [1, 256], strides = [1, 1]} : vector<9x256xf32> to vector<1x256xf32>
    %50 = vector.broadcast %49 : vector<1x256xf32> to vector<4x256xf32>
    %51 = arith.mulf %48, %50 : vector<4x256xf32>
    %c254_i32 = arith.constant 254 : i32
    %52 = tpu.dynamic_rotate %35 by %c254_i32 dim 1 : vector<4x256xf32>, i32 -> vector<4x256xf32>
    %53 = vector.extract_strided_slice %34 {offsets = [5, 0], sizes = [1, 256], strides = [1, 1]} : vector<9x256xf32> to vector<1x256xf32>
    %54 = vector.broadcast %53 : vector<1x256xf32> to vector<4x256xf32>
    %55 = arith.mulf %52, %54 : vector<4x256xf32>
    %c226_i32 = arith.constant 226 : i32
    %56 = tpu.dynamic_rotate %35 by %c226_i32 dim 1 : vector<4x256xf32>, i32 -> vector<4x256xf32>
    %57 = vector.extract_strided_slice %34 {offsets = [6, 0], sizes = [1, 256], strides = [1, 1]} : vector<9x256xf32> to vector<1x256xf32>
    %58 = vector.broadcast %57 : vector<1x256xf32> to vector<4x256xf32>
    %59 = arith.mulf %56, %58 : vector<4x256xf32>
    %c224_i32 = arith.constant 224 : i32
    %60 = tpu.dynamic_rotate %35 by %c224_i32 dim 1 : vector<4x256xf32>, i32 -> vector<4x256xf32>
    %61 = vector.extract_strided_slice %34 {offsets = [7, 0], sizes = [1, 256], strides = [1, 1]} : vector<9x256xf32> to vector<1x256xf32>
    %62 = vector.broadcast %61 : vector<1x256xf32> to vector<4x256xf32>
    %63 = arith.mulf %60, %62 : vector<4x256xf32>
    %c222_i32 = arith.constant 222 : i32
    %64 = tpu.dynamic_rotate %35 by %c222_i32 dim 1 : vector<4x256xf32>, i32 -> vector<4x256xf32>
    %65 = vector.extract_strided_slice %34 {offsets = [8, 0], sizes = [1, 256], strides = [1, 1]} : vector<9x256xf32> to vector<1x256xf32>
    %66 = vector.broadcast %65 : vector<1x256xf32> to vector<4x256xf32>
    %67 = arith.mulf %64, %66 : vector<4x256xf32>
    %68 = tpu.concatenate %39, %43, %47, %51, %35, %55, %59, %63, %67 in 0 : vector<4x256xf32>, vector<4x256xf32>, vector<4x256xf32>, vector<4x256xf32>, vector<4x256xf32>, vector<4x256xf32>, vector<4x256xf32>, vector<4x256xf32>, vector<4x256xf32> -> vector<36x256xf32>
    %c0_17 = arith.constant 0 : index
    %c0_18 = arith.constant 0 : index
    %c0_19 = arith.constant 0 : index
    %c0_20 = arith.constant 0 : index
    %69 = vector.load %arg4[%c0_17, %c0_18, %c0_19, %c0_20] : memref<1x1x4x36xf32, #tpu.memory_space<vmem>>, vector<1x1x4x36xf32>
    %70 = vector.shape_cast %69 : vector<1x1x4x36xf32> to vector<4x36xf32>
    %cst_21 = arith.constant dense<0.000000e+00> : vector<4x256xf32>
    %71 = tpu.matmul %70, %68, %cst_21 {dimension_numbers = #tpu.dot_dimension_numbers<[1], [0], [0], [1], [0, 0, 1, 1], [], []>} : vector<4x36xf32>, vector<36x256xf32>, vector<4x256xf32> -> vector<4x256xf32>
    %c0_22 = arith.constant 0 : index
    %c0_23 = arith.constant 0 : index
    %c0_24 = arith.constant 0 : index
    %c0_25 = arith.constant 0 : index
    %72 = vector.load %arg6[%c0_22, %c0_23, %c0_24, %c0_25] : memref<1x1x4x2xf32, #tpu.memory_space<vmem>>, vector<1x1x4x2xf32>
    %73 = vector.shape_cast %72 : vector<1x1x4x2xf32> to vector<4x2xf32>
    %cst_26 = arith.constant dense<0.000000e+00> : vector<4xf32>
    %74 = vector.multi_reduction <add>, %71, %cst_26 [1] : vector<4x256xf32> to vector<4xf32>
    %75 = vector.shape_cast %74 : vector<4xf32> to vector<4x1xf32>
    %cst_27 = arith.constant 3.906250e-03 : f32
    %76 = vector.broadcast %cst_27 : f32 to vector<4x1xf32>
    %77 = arith.mulf %75, %76 : vector<4x1xf32>
    %78 = arith.mulf %71, %71 : vector<4x256xf32>
    %cst_28 = arith.constant dense<0.000000e+00> : vector<4xf32>
    %79 = vector.multi_reduction <add>, %78, %cst_28 [1] : vector<4x256xf32> to vector<4xf32>
    %80 = vector.shape_cast %79 : vector<4xf32> to vector<4x1xf32>
    %cst_29 = arith.constant 3.906250e-03 : f32
    %81 = vector.broadcast %cst_29 : f32 to vector<4x1xf32>
    %82 = arith.mulf %80, %81 : vector<4x1xf32>
    %83 = arith.mulf %77, %77 : vector<4x1xf32>
    %84 = arith.subf %82, %83 : vector<4x1xf32>
    %cst_30 = arith.constant 0.000000e+00 : f32
    %85 = vector.broadcast %cst_30 : f32 to vector<4x1xf32>
    %86 = arith.maximumf %84, %85 : vector<4x1xf32>
    %87 = vector.extract_strided_slice %73 {offsets = [0, 0], sizes = [4, 1], strides = [1, 1]} : vector<4x2xf32> to vector<4x1xf32>
    %cst_31 = arith.constant 9.99999974E-6 : f32
    %88 = vector.broadcast %cst_31 : f32 to vector<4x1xf32>
    %89 = arith.addf %86, %88 : vector<4x1xf32>
    %90 = math.rsqrt %89 : vector<4x1xf32>
    %91 = arith.mulf %87, %90 : vector<4x1xf32>
    %92 = vector.extract_strided_slice %73 {offsets = [0, 1], sizes = [4, 1], strides = [1, 1]} : vector<4x2xf32> to vector<4x1xf32>
    %93 = arith.mulf %77, %91 : vector<4x1xf32>
    %94 = arith.subf %92, %93 : vector<4x1xf32>
    %95 = vector.broadcast %91 : vector<4x1xf32> to vector<4x256xf32>
    %96 = arith.mulf %71, %95 : vector<4x256xf32>
    %97 = vector.broadcast %94 : vector<4x1xf32> to vector<4x256xf32>
    %98 = arith.addf %96, %97 : vector<4x256xf32>
    %cst_32 = arith.constant 0.000000e+00 : f32
    %99 = vector.broadcast %cst_32 : f32 to vector<4x256xf32>
    %100 = arith.maximumf %98, %99 : vector<4x256xf32>
    %101 = vector.extract_strided_slice %33 {offsets = [4, 0], sizes = [4, 256], strides = [1, 1]} : vector<8x256xf32> to vector<4x256xf32>
    %102 = tpu.concatenate %100, %101 in 0 : vector<4x256xf32>, vector<4x256xf32> -> vector<8x256xf32>
    %c0_33 = arith.constant 0 : index
    %c0_34 = arith.constant 0 : index
    %c0_35 = arith.constant 0 : index
    %103 = vector.load %arg7[%c0_33, %c0_34, %c0_35] : memref<1x4x8xf32, #tpu.memory_space<vmem>>, vector<1x4x8xf32>
    %104 = vector.shape_cast %103 : vector<1x4x8xf32> to vector<4x8xf32>
    %cst_36 = arith.constant dense<0.000000e+00> : vector<4x256xf32>
    %105 = tpu.matmul %104, %102, %cst_36 {dimension_numbers = #tpu.dot_dimension_numbers<[1], [0], [0], [1], [0, 0, 1, 1], [], []>} : vector<4x8xf32>, vector<8x256xf32>, vector<4x256xf32> -> vector<4x256xf32>
    %c0_37 = arith.constant 0 : index
    %c0_38 = arith.constant 0 : index
    %c0_39 = arith.constant 0 : index
    %106 = vector.load %arg8[%c0_37, %c0_38, %c0_39] : memref<1x4x2xf32, #tpu.memory_space<vmem>>, vector<1x4x2xf32>
    %107 = vector.shape_cast %106 : vector<1x4x2xf32> to vector<4x2xf32>
    %cst_40 = arith.constant dense<0.000000e+00> : vector<4xf32>
    %108 = vector.multi_reduction <add>, %105, %cst_40 [1] : vector<4x256xf32> to vector<4xf32>
    %109 = vector.shape_cast %108 : vector<4xf32> to vector<4x1xf32>
    %cst_41 = arith.constant 3.906250e-03 : f32
    %110 = vector.broadcast %cst_41 : f32 to vector<4x1xf32>
    %111 = arith.mulf %109, %110 : vector<4x1xf32>
    %112 = arith.mulf %105, %105 : vector<4x256xf32>
    %cst_42 = arith.constant dense<0.000000e+00> : vector<4xf32>
    %113 = vector.multi_reduction <add>, %112, %cst_42 [1] : vector<4x256xf32> to vector<4xf32>
    %114 = vector.shape_cast %113 : vector<4xf32> to vector<4x1xf32>
    %cst_43 = arith.constant 3.906250e-03 : f32
    %115 = vector.broadcast %cst_43 : f32 to vector<4x1xf32>
    %116 = arith.mulf %114, %115 : vector<4x1xf32>
    %117 = arith.mulf %111, %111 : vector<4x1xf32>
    %118 = arith.subf %116, %117 : vector<4x1xf32>
    %cst_44 = arith.constant 0.000000e+00 : f32
    %119 = vector.broadcast %cst_44 : f32 to vector<4x1xf32>
    %120 = arith.maximumf %118, %119 : vector<4x1xf32>
    %121 = vector.extract_strided_slice %107 {offsets = [0, 0], sizes = [4, 1], strides = [1, 1]} : vector<4x2xf32> to vector<4x1xf32>
    %cst_45 = arith.constant 9.99999974E-6 : f32
    %122 = vector.broadcast %cst_45 : f32 to vector<4x1xf32>
    %123 = arith.addf %120, %122 : vector<4x1xf32>
    %124 = math.rsqrt %123 : vector<4x1xf32>
    %125 = arith.mulf %121, %124 : vector<4x1xf32>
    %126 = vector.extract_strided_slice %107 {offsets = [0, 1], sizes = [4, 1], strides = [1, 1]} : vector<4x2xf32> to vector<4x1xf32>
    %127 = arith.mulf %111, %125 : vector<4x1xf32>
    %128 = arith.subf %126, %127 : vector<4x1xf32>
    %129 = vector.broadcast %125 : vector<4x1xf32> to vector<4x256xf32>
    %130 = arith.mulf %105, %129 : vector<4x256xf32>
    %131 = vector.broadcast %128 : vector<4x1xf32> to vector<4x256xf32>
    %132 = arith.addf %130, %131 : vector<4x256xf32>
    %c0_46 = arith.constant 0 : index
    %c0_47 = arith.constant 0 : index
    %c0_48 = arith.constant 0 : index
    %133 = vector.load %arg9[%c0_46, %c0_47, %c0_48] : memref<1x4x256xf32, #tpu.memory_space<vmem>>, vector<1x4x256xf32>
    %134 = vector.shape_cast %133 : vector<1x4x256xf32> to vector<4x256xf32>
    %135 = vector.shape_cast %132 : vector<4x256xf32> to vector<1x4x256xf32>
    tpu.vector_store %arg9[%c0_46, %c0_47, %c0_48], %135 {strides = array<i32>} : memref<1x4x256xf32, #tpu.memory_space<vmem>>, vector<1x4x256xf32>,
    return
  }
  func.func @transform_0(%arg0: i32) -> (i32, i32, i32) {
    %c0_i32 = arith.constant 0 : i32
    %c0_i32_0 = arith.constant 0 : i32
    %c0_i32_1 = arith.constant 0 : i32
    return %arg0, %c0_i32, %c0_i32_0 : i32, i32, i32
  }
  func.func @transform_1(%arg0: i32) -> (i32, i32, i32) {
    %c0_i32 = arith.constant 0 : i32
    %c0_i32_0 = arith.constant 0 : i32
    %c0_i32_1 = arith.constant 0 : i32
    return %arg0, %c0_i32, %c0_i32_0 : i32, i32, i32
  }
  func.func @transform_2(%arg0: i32) -> (i32, i32, i32) {
    %c0_i32 = arith.constant 0 : i32
    %c0_i32_0 = arith.constant 0 : i32
    %c0_i32_1 = arith.constant 0 : i32
    return %arg0, %c0_i32, %c0_i32_0 : i32, i32, i32
  }
  func.func @transform_3(%arg0: i32) -> (i32, i32, i32, i32) {
    %c0_i32 = arith.constant 0 : i32
    %c0_i32_0 = arith.constant 0 : i32
    %c0_i32_1 = arith.constant 0 : i32
    %c0_i32_2 = arith.constant 0 : i32
    return %arg0, %c0_i32, %c0_i32_0, %c0_i32_1 : i32, i32, i32, i32
  }
  func.func @transform_4(%arg0: i32) -> (i32, i32) {
    %c0_i32 = arith.constant 0 : i32
    %c0_i32_0 = arith.constant 0 : i32
    %c0_i32_1 = arith.constant 0 : i32
    return %c0_i32, %c0_i32_0 : i32, i32
  }
  func.func @transform_5(%arg0: i32) -> (i32, i32, i32, i32) {
    %c0_i32 = arith.constant 0 : i32
    %c0_i32_0 = arith.constant 0 : i32
    %c0_i32_1 = arith.constant 0 : i32
    %c0_i32_2 = arith.constant 0 : i32
    return %arg0, %c0_i32, %c0_i32_0, %c0_i32_1 : i32, i32, i32, i32
  }
  func.func @transform_6(%arg0: i32) -> (i32, i32, i32) {
    %c0_i32 = arith.constant 0 : i32
    %c0_i32_0 = arith.constant 0 : i32
    %c0_i32_1 = arith.constant 0 : i32
    return %arg0, %c0_i32, %c0_i32_0 : i32, i32, i32
  }
  func.func @transform_7(%arg0: i32) -> (i32, i32, i32) {
    %c0_i32 = arith.constant 0 : i32
    %c0_i32_0 = arith.constant 0 : i32
    %c0_i32_1 = arith.constant 0 : i32
    return %arg0, %c0_i32, %c0_i32_0 : i32, i32, i32
  }
  func.func @transform_8(%arg0: i32) -> (i32, i32, i32) {
    %c0_i32 = arith.constant 0 : i32
    %c0_i32_0 = arith.constant 0 : i32
    %c0_i32_1 = arith.constant 0 : i32
    return %arg0, %c0_i32, %c0_i32_0 : i32, i32, i32
  }
}

</mosaic_0001>

<llo_original>
// kernel: bottle2neck_forward.1
$region0: #{bottle2neck_forward.1}
  #allocation0 [shape = 'u32[]', space=smem, size = 0x4, offset = 0x4, fixed_abs, tag = 'smem constant byte address 0x4 - core index']
  #allocation1 [shape = 'u32[144,128]{1,0:T(1,128)}', space=vmem, size = 0x12000, scoped, tag = 'internal scratch']
  %s0 = inlined_call_operand.vmem [shape: f32[2,4,256], index: 0, kind: input, shape index: {}]
  %s1 = inlined_call_operand.vmem [shape: f32[2,8,4], index: 1, kind: input, shape index: {}]
  %s2 = inlined_call_operand.vmem [shape: f32[2,8,2], index: 2, kind: input, shape index: {}]
  %s3 = inlined_call_operand.vmem [shape: f32[2,1,4,36], index: 3, kind: input, shape index: {}]
  %s4 = inlined_call_operand.vmem [shape: f32[9,256], index: 4, kind: input, shape index: {}]
  %s5 = inlined_call_operand.vmem [shape: f32[2,1,4,2], index: 5, kind: input, shape index: {}]
  %s6 = inlined_call_operand.vmem [shape: f32[2,4,8], index: 6, kind: input, shape index: {}]
  %s7 = inlined_call_operand.vmem [shape: f32[2,4,2], index: 7, kind: input, shape index: {}]
  %s8 = inlined_call_operand.vmem [shape: f32[2,4,256], index: 8, kind: output, shape index: {}]
  %s9 = sld [smem:[#allocation0]]
  $region65: #{bottle2neck_forward.1} parent=0
    _
  %s11 = ssub.s32 1, %s9
  %s12 = scalar_select 0, %s11, %s9
  loop: start=0, step=1, limit=4
  $region2: #{bottle2neck_forward.1} parent=0 // loop_pre_header
    _
  $region3: #{bottle2neck_forward.1} parent=0 // loop_header
    %s14 = sphi 0, %s18
    %p15 = scmp.ge.s32.totalorder %s14, 4
    %s24 = sphi 0, %s26
    %s27 = sphi 0, %s24
    %s28 = sphi 0, %s27
    %s44 = sphi 0, %s28
    %s50 = sphi 0, %s52
    %s53 = sphi 0, %s50
    %s54 = sphi 0, %s53
    %s70 = sphi 0, %s54
    %s76 = sphi 0, %s78
    %s79 = sphi 0, %s76
    %s80 = sphi 0, %s79
    %s96 = sphi 0, %s80
    %s102 = sphi 0, %s104
    %s105 = sphi 0, %s102
    %s106 = sphi 0, %s105
    %s122 = sphi 0, %s106
    %s126 = sphi 0, %s126
    %s128 = sphi 0, %s126
    %s129 = sphi 0, %s128
    %s143 = sphi 0, %s129
    %s149 = sphi 0, %s151
    %s152 = sphi 0, %s149
    %s153 = sphi 0, %s152
    %s169 = sphi 0, %s153
    %s175 = sphi 0, %s177
    %s178 = sphi 0, %s175
    %s179 = sphi 0, %s178
    %s195 = sphi 0, %s179
    %s201 = sphi 0, %s203
    %s204 = sphi 0, %s201
    %s205 = sphi 0, %s204
    %s221 = sphi 0, %s205
    %s227 = sphi 0, %s229
    %s230 = sphi 0, %s227
    %s231 = sphi 0, %s230
    %s247 = sphi 0, %s231
  $region4: #{bottle2neck_forward.1} parent=0 // loop_header_branch
    %17 = sbr.rel (%p15) target = $region8
  $region5: #{bottle2neck_forward.1} parent=0 // loop_body
    %s19 = ssub.s32 %s14, 1
    %s20 = ssub.s32 %s14, 2
    %s21 = sadd.s32 %s14, 1
    %s22 = ssub.s32 %s14, %s21
    %p23 = scmp.eq.s32.totalorder %s22, 0
    %s25 = sadd.s32 %s24, 1
    %s26 = scalar_select %p23, %s24, %s25
    %p29 = pneg %p23
    %p30 = scmp.eq.s32.totalorder %s14, 1
    %p31 = por %p29, %p30
    %p32 = scmp.ne.s32.totalorder %s24, %s27
    %p33 = scmp.eq.s32.totalorder %s14, 0
    %p34 = por %p32, %p33
    %p35 = scmp.ne.s32.totalorder %s24, %s27
    %p36 = scmp.eq.s32.totalorder %s19, 1
    %p37 = por %p35, %p36
    %p38 = scmp.ne.s32.totalorder %s27, %s28
    %p39 = scmp.eq.s32.totalorder %s19, 0
    %p40 = por %p38, %p39
    %p41 = scmp.ne.s32.totalorder %s27, %s28
    %p42 = scmp.eq.s32.totalorder %s20, 1
    %p43 = por %p41, %p42
    %p45 = scmp.ne.s32.totalorder %s28, %s44
    %p46 = scmp.eq.s32.totalorder %s20, 0
    %p47 = por %p45, %p46
    %s48 = ssub.s32 %s14, %s21
    %p49 = scmp.eq.s32.totalorder %s48, 0
    %s51 = sadd.s32 %s50, 1
    %s52 = scalar_select %p49, %s50, %s51
    %p55 = pneg %p49
    %p56 = scmp.eq.s32.totalorder %s14, 1
    %p57 = por %p55, %p56
    %p58 = scmp.ne.s32.totalorder %s50, %s53
    %p59 = scmp.eq.s32.totalorder %s14, 0
    %p60 = por %p58, %p59
    %p61 = scmp.ne.s32.totalorder %s50, %s53
    %p62 = scmp.eq.s32.totalorder %s19, 1
    %p63 = por %p61, %p62
    %p64 = scmp.ne.s32.totalorder %s53, %s54
    %p65 = scmp.eq.s32.totalorder %s19, 0
    %p66 = por %p64, %p65
    %p67 = scmp.ne.s32.totalorder %s53, %s54
    %p68 = scmp.eq.s32.totalorder %s20, 1
    %p69 = por %p67, %p68
    %p71 = scmp.ne.s32.totalorder %s54, %s70
    %p72 = scmp.eq.s32.totalorder %s20, 0
    %p73 = por %p71, %p72
    %s74 = ssub.s32 %s14, %s21
    %p75 = scmp.eq.s32.totalorder %s74, 0
    %s77 = sadd.s32 %s76, 1
    %s78 = scalar_select %p75, %s76, %s77
    %p81 = pneg %p75
    %p82 = scmp.eq.s32.totalorder %s14, 1
    %p83 = por %p81, %p82
    %p84 = scmp.ne.s32.totalorder %s76, %s79
    %p85 = scmp.eq.s32.totalorder %s14, 0
    %p86 = por %p84, %p85
    %p87 = scmp.ne.s32.totalorder %s76, %s79
    %p88 = scmp.eq.s32.totalorder %s19, 1
    %p89 = por %p87, %p88
    %p90 = scmp.ne.s32.totalorder %s79, %s80
    %p91 = scmp.eq.s32.totalorder %s19, 0
    %p92 = por %p90, %p91
    %p93 = scmp.ne.s32.totalorder %s79, %s80
    %p94 = scmp.eq.s32.totalorder %s20, 1
    %p95 = por %p93, %p94
    %p97 = scmp.ne.s32.totalorder %s80, %s96
    %p98 = scmp.eq.s32.totalorder %s20, 0
    %p99 = por %p97, %p98
    %s100 = ssub.s32 %s14, %s21
    %p101 = scmp.eq.s32.totalorder %s100, 0
    %s103 = sadd.s32 %s102, 1
    %s104 = scalar_select %p101, %s102, %s103
    %p107 = pneg %p101
    %p108 = scmp.eq.s32.totalorder %s14, 1
    %p109 = por %p107, %p108
    %p110 = scmp.ne.s32.totalorder %s102, %s105
    %p111 = scmp.eq.s32.totalorder %s14, 0
    %p112 = por %p110, %p111
    %p113 = scmp.ne.s32.totalorder %s102, %s105
    %p114 = scmp.eq.s32.totalorder %s19, 1
    %p115 = por %p113, %p114
    %p116 = scmp.ne.s32.totalorder %s105, %s106
    %p117 = scmp.eq.s32.totalorder %s19, 0
    %p118 = por %p116, %p117
    %p119 = scmp.ne.s32.totalorder %s105, %s106
    %p120 = scmp.eq.s32.totalorder %s20, 1
    %p121 = por %p119, %p120
    %p123 = scmp.ne.s32.totalorder %s106, %s122
    %p124 = scmp.eq.s32.totalorder %s20, 0
    %p125 = por %p123, %p124
    %s127 = sadd.s32 %s126, 1
    %p130 = scmp.eq.s32.totalorder %s14, 1
    %p131 = scmp.ne.s32.totalorder %s126, %s128
    %p132 = scmp.eq.s32.totalorder %s14, 0
    %p133 = por %p131, %p132
    %p134 = scmp.ne.s32.totalorder %s126, %s128
    %p135 = scmp.eq.s32.totalorder %s19, 1
    %p136 = por %p134, %p135
    %p137 = scmp.ne.s32.totalorder %s128, %s129
    %p138 = scmp.eq.s32.totalorder %s19, 0
    %p139 = por %p137, %p138
    %p140 = scmp.ne.s32.totalorder %s128, %s129
    %p141 = scmp.eq.s32.totalorder %s20, 1
    %p142 = por %p140, %p141
    %p144 = scmp.ne.s32.totalorder %s129, %s143
    %p145 = scmp.eq.s32.totalorder %s20, 0
    %p146 = por %p144, %p145
    %s147 = ssub.s32 %s14, %s21
    %p148 = scmp.eq.s32.totalorder %s147, 0
    %s150 = sadd.s32 %s149, 1
    %s151 = scalar_select %p148, %s149, %s150
    %p154 = pneg %p148
    %p155 = scmp.eq.s32.totalorder %s14, 1
    %p156 = por %p154, %p155
    %p157 = scmp.ne.s32.totalorder %s149, %s152
    %p158 = scmp.eq.s32.totalorder %s14, 0
    %p159 = por %p157, %p158
    %p160 = scmp.ne.s32.totalorder %s149, %s152
    %p161 = scmp.eq.s32.totalorder %s19, 1
    %p162 = por %p160, %p161
    %p163 = scmp.ne.s32.totalorder %s152, %s153
    %p164 = scmp.eq.s32.totalorder %s19, 0
    %p165 = por %p163, %p164
    %p166 = scmp.ne.s32.totalorder %s152, %s153
    %p167 = scmp.eq.s32.totalorder %s20, 1
    %p168 = por %p166, %p167
    %p170 = scmp.ne.s32.totalorder %s153, %s169
    %p171 = scmp.eq.s32.totalorder %s20, 0
    %p172 = por %p170, %p171
    %s173 = ssub.s32 %s14, %s21
    %p174 = scmp.eq.s32.totalorder %s173, 0
    %s176 = sadd.s32 %s175, 1
    %s177 = scalar_select %p174, %s175, %s176
    %p180 = pneg %p174
    %p181 = scmp.eq.s32.totalorder %s14, 1
    %p182 = por %p180, %p181
    %p183 = scmp.ne.s32.totalorder %s175, %s178
    %p184 = scmp.eq.s32.totalorder %s14, 0
    %p185 = por %p183, %p184
    %p186 = scmp.ne.s32.totalorder %s175, %s178
    %p187 = scmp.eq.s32.totalorder %s19, 1
    %p188 = por %p186, %p187
    %p189 = scmp.ne.s32.totalorder %s178, %s179
    %p190 = scmp.eq.s32.totalorder %s19, 0
    %p191 = por %p189, %p190
    %p192 = scmp.ne.s32.totalorder %s178, %s179
    %p193 = scmp.eq.s32.totalorder %s20, 1
    %p194 = por %p192, %p193
    %p196 = scmp.ne.s32.totalorder %s179, %s195
    %p197 = scmp.eq.s32.totalorder %s20, 0
    %p198 = por %p196, %p197
    %s199 = ssub.s32 %s14, %s21
    %p200 = scmp.eq.s32.totalorder %s199, 0
    %s202 = sadd.s32 %s201, 1
    %s203 = scalar_select %p200, %s201, %s202
    %p206 = pneg %p200
    %p207 = scmp.eq.s32.totalorder %s14, 1
    %p208 = por %p206, %p207
    %p209 = scmp.ne.s32.totalorder %s201, %s204
    %p210 = scmp.eq.s32.totalorder %s14, 0
    %p211 = por %p209, %p210
    %p212 = scmp.ne.s32.totalorder %s201, %s204
    %p213 = scmp.eq.s32.totalorder %s19, 1
    %p214 = por %p212, %p213
    %p215 = scmp.ne.s32.totalorder %s204, %s205
    %p216 = scmp.eq.s32.totalorder %s19, 0
    %p217 = por %p215, %p216
    %p218 = scmp.ne.s32.totalorder %s204, %s205
    %p219 = scmp.eq.s32.totalorder %s20, 1
    %p220 = por %p218, %p219
    %p222 = scmp.ne.s32.totalorder %s205, %s221
    %p223 = scmp.eq.s32.totalorder %s20, 0
    %p224 = por %p222, %p223
    %s225 = ssub.s32 %s14, %s21
    %p226 = scmp.eq.s32.totalorder %s225, 0
    %s228 = sadd.s32 %s227, 1
    %s229 = scalar_select %p226, %s227, %s228
    %p232 = pneg %p226
    %p233 = scmp.eq.s32.totalorder %s14, 1
    %p234 = por %p232, %p233
    %p235 = scmp.ne.s32.totalorder %s227, %s230
    %p236 = scmp.eq.s32.totalorder %s14, 0
    %p237 = por %p235, %p236
    %p238 = scmp.ne.s32.totalorder %s227, %s230
    %p239 = scmp.eq.s32.totalorder %s19, 1
    %p240 = por %p238, %p239
    %p241 = scmp.ne.s32.totalorder %s230, %s231
    %p242 = scmp.eq.s32.totalorder %s19, 0
    %p243 = por %p241, %p242
    %p244 = scmp.ne.s32.totalorder %s230, %s231
    %p245 = scmp.eq.s32.totalorder %s20, 1
    %p246 = por %p244, %p245
    %p248 = scmp.ne.s32.totalorder %s231, %s247
    %p249 = scmp.eq.s32.totalorder %s20, 0
    %p250 = por %p248, %p249
    %p251 = scmp.le.s32.totalorder 1, %s14
    %p252 = scmp.lt.s32.totalorder %s14, 3
    %p253 = pnand %p251, %p252
    %p254 = pneg %p253
    // Predicated region
    $region9: #{bottle2neck_forward.1} parent=5 // pred_check
      _
    $region10: #{bottle2neck_forward.1} parent=5 // pred_check_branch
      %256 = sbr.rel (%p253) target = $region12
    $region11: #{bottle2neck_forward.1} parent=5 // pred_region
      %s257 = ssub.s32 %s14, 1
      // Predicated region
      $region13: #{bottle2neck_forward.1} parent=11 // pred_check
        %p258 = pneg %p139
      $region14: #{bottle2neck_forward.1} parent=11 // pred_check_branch
        %260 = sbr.rel (%p258) target = $region16
      $region15: #{bottle2neck_forward.1} parent=11 // pred_region
        _
      $region16: #{bottle2neck_forward.1} parent=11 // pred_fallthru
        _
    $region12: #{bottle2neck_forward.1} parent=5 // pred_fallthru
      _
    %p261 = scmp.lt.s32.totalorder %s14, 2
    // Predicated region
    $region17: #{bottle2neck_forward.1} parent=5 // pred_check
      %p262 = pneg %p261
    $region18: #{bottle2neck_forward.1} parent=5 // pred_check_branch
      %264 = sbr.rel (%p262) target = $region20
    $region19: #{bottle2neck_forward.1} parent=5 // pred_region
      // Predicated region
      $region21: #{bottle2neck_forward.1} parent=19 // pred_check
        %p265 = pneg %p34
      $region22: #{bottle2neck_forward.1} parent=19 // pred_check_branch
        %267 = sbr.rel (%p265) target = $region24
      $region23: #{bottle2neck_forward.1} parent=19 // pred_region
        %p268 = scmp.lt.s32.totalorder %s14, 1
        %s269 = scalar_select %p268, %s14, 1
        %s270 = smul.addr %s269, 2
        %s271 = smul.addr %s270, 4
        %s272 = scalar_lea.vmem %s0, %s271
      $region24: #{bottle2neck_forward.1} parent=19 // pred_fallthru
        _
      // Predicated region
      $region25: #{bottle2neck_forward.1} parent=19 // pred_check
        %p273 = pneg %p60
      $region26: #{bottle2neck_forward.1} parent=19 // pred_check_branch
        %275 = sbr.rel (%p273) target = $region28
      $region27: #{bottle2neck_forward.1} parent=19 // pred_region
        %p276 = scmp.lt.s32.totalorder %s14, 1
        %s277 = scalar_select %p276, %s14, 1
        %s278 = smul.addr %s277, 8
        %s279 = scalar_lea.vmem %s1, %s278
      $region28: #{bottle2neck_forward.1} parent=19 // pred_fallthru
        _
      // Predicated region
      $region29: #{bottle2neck_forward.1} parent=19 // pred_check
        %p280 = pneg %p86
      $region30: #{bottle2neck_forward.1} parent=19 // pred_check_branch
        %282 = sbr.rel (%p280) target = $region32
      $region31: #{bottle2neck_forward.1} parent=19 // pred_region
        %p283 = scmp.lt.s32.totalorder %s14, 1
        %s284 = scalar_select %p283, %s14, 1
        %s285 = smul.addr %s284, 8
        %s286 = scalar_lea.vmem %s2, %s285
      $region32: #{bottle2neck_forward.1} parent=19 // pred_fallthru
        _
      // Predicated region
      $region33: #{bottle2neck_forward.1} parent=19 // pred_check
        %p287 = pneg %p112
      $region34: #{bottle2neck_forward.1} parent=19 // pred_check_branch
        %289 = sbr.rel (%p287) target = $region36
      $region35: #{bottle2neck_forward.1} parent=19 // pred_region
        %p290 = scmp.lt.s32.totalorder %s14, 1
        %s291 = scalar_select %p290, %s14, 1
        %s292 = smul.addr %s291, 4
        %s293 = scalar_lea.vmem %s3, %s292
      $region36: #{bottle2neck_forward.1} parent=19 // pred_fallthru
        _
      // Predicated region
      $region37: #{bottle2neck_forward.1} parent=19 // pred_check
        %p294 = pneg %p159
      $region38: #{bottle2neck_forward.1} parent=19 // pred_check_branch
        %296 = sbr.rel (%p294) target = $region40
      $region39: #{bottle2neck_forward.1} parent=19 // pred_region
        %p297 = scmp.lt.s32.totalorder %s14, 1
        %s298 = scalar_select %p297, %s14, 1
        %s299 = smul.addr %s298, 4
        %s300 = scalar_lea.vmem %s5, %s299
      $region40: #{bottle2neck_forward.1} parent=19 // pred_fallthru
        _
      // Predicated region
      $region41: #{bottle2neck_forward.1} parent=19 // pred_check
        %p301 = pneg %p185
      $region42: #{bottle2neck_forward.1} parent=19 // pred_check_branch
        %303 = sbr.rel (%p301) target = $region44
      $region43: #{bottle2neck_forward.1} parent=19 // pred_region
        %p304 = scmp.lt.s32.totalorder %s14, 1
        %s305 = scalar_select %p304, %s14, 1
        %s306 = smul.addr %s305, 4
        %s307 = scalar_lea.vmem %s6, %s306
      $region44: #{bottle2neck_forward.1} parent=19 // pred_fallthru
        _
      // Predicated region
      $region45: #{bottle2neck_forward.1} parent=19 // pred_check
        %p308 = pneg %p211
      $region46: #{bottle2neck_forward.1} parent=19 // pred_check_branch
        %310 = sbr.rel (%p308) target = $region48
      $region47: #{bottle2neck_forward.1} parent=19 // pred_region
        %p311 = scmp.lt.s32.totalorder %s14, 1
        %s312 = scalar_select %p311, %s14, 1
        %s313 = smul.addr %s312, 4
        %s314 = scalar_lea.vmem %s7, %s313
      $region48: #{bottle2neck_forward.1} parent=19 // pred_fallthru
        _
    $region20: #{bottle2neck_forward.1} parent=5 // pred_fallthru
      _
    %p315 = scmp.le.s32.totalorder 1, %s14
    %p316 = scmp.lt.s32.totalorder %s14, 3
    %p317 = pnand %p315, %p316
    %p318 = pneg %p317
    // Predicated region
    $region49: #{bottle2neck_forward.1} parent=5 // pred_check
      _
    $region50: #{bottle2neck_forward.1} parent=5 // pred_check_branch
      %320 = sbr.rel (%p317) target = $region52
    $region51: #{bottle2neck_forward.1} parent=5 // pred_region
      %s321 = ssub.s32 %s14, 1
      %p322 = scmp.lt.s32.totalorder %s19, 1
      %s323 = scalar_select %p322, %s19, 1
      %s324 = smul.addr %s323, 2
      %s325 = smul.addr %s324, 4
      %s326 = scalar_lea.vmem %s0, %s325
      %p327 = pneg %p40
      %p328 = pneg %p37
      %p329 = scmp.lt.s32.totalorder %s19, 1
      %s330 = scalar_select %p329, %s19, 1
      %s331 = smul.addr %s330, 8
      %s332 = scalar_lea.vmem %s1, %s331
      %p333 = pneg %p66
      %p334 = pneg %p63
      %p335 = scmp.lt.s32.totalorder %s19, 1
      %s336 = scalar_select %p335, %s19, 1
      %s337 = smul.addr %s336, 8
      %s338 = scalar_lea.vmem %s2, %s337
      %p339 = pneg %p92
      %p340 = pneg %p89
      %p341 = scmp.lt.s32.totalorder %s19, 1
      %s342 = scalar_select %p341, %s19, 1
      %s343 = smul.addr %s342, 4
      %s344 = scalar_lea.vmem %s3, %s343
      %p345 = pneg %p118
      %p346 = pneg %p115
      %p347 = pneg %p139
      %p348 = pneg %p136
      %p349 = scmp.lt.s32.totalorder %s19, 1
      %s350 = scalar_select %p349, %s19, 1
      %s351 = smul.addr %s350, 4
      %s352 = scalar_lea.vmem %s5, %s351
      %p353 = pneg %p165
      %p354 = pneg %p162
      %p355 = scmp.lt.s32.totalorder %s19, 1
      %s356 = scalar_select %p355, %s19, 1
      %s357 = smul.addr %s356, 4
      %s358 = scalar_lea.vmem %s6, %s357
      %p359 = pneg %p191
      %p360 = pneg %p188
      %p361 = scmp.lt.s32.totalorder %s19, 1
      %s362 = scalar_select %p361, %s19, 1
      %s363 = smul.addr %s362, 4
      %s364 = scalar_lea.vmem %s7, %s363
      %p365 = pneg %p217
      %p366 = pneg %p214
      %p367 = pneg %p243
      %p368 = pneg %p240
      %p369 = scmp.lt.s32.totalorder %s19, 1
      %s370 = scalar_select %p369, %s19, 1
      %s371 = smul.addr %s370, 2
      %s372 = smul.addr %s371, 4
      %s373 = scalar_lea.vmem %s8, %s372
      %p374 = scmp.lt.s32.totalorder %s19, 1
      %s375 = scalar_select %p374, %s19, 1
      %s376 = smul.addr %s375, 2
      %s377 = smul.addr %s376, 4
      %s378 = scalar_lea.vmem %s0, %s377
      %p379 = scmp.lt.s32.totalorder %s19, 1
      %s380 = scalar_select %p379, %s19, 1
      %s381 = smul.addr %s380, 8
      %s382 = scalar_lea.vmem %s1, %s381
      %p383 = scmp.lt.s32.totalorder %s19, 1
      %s384 = scalar_select %p383, %s19, 1
      %s385 = smul.addr %s384, 8
      %s386 = scalar_lea.vmem %s2, %s385
      %p387 = scmp.lt.s32.totalorder %s19, 1
      %s388 = scalar_select %p387, %s19, 1
      %s389 = smul.addr %s388, 4
      %s390 = scalar_lea.vmem %s3, %s389
      %p391 = scmp.lt.s32.totalorder %s19, 1
      %s392 = scalar_select %p391, %s19, 1
      %s393 = smul.addr %s392, 4
      %s394 = scalar_lea.vmem %s5, %s393
      %p395 = scmp.lt.s32.totalorder %s19, 1
      %s396 = scalar_select %p395, %s19, 1
      %s397 = smul.addr %s396, 4
      %s398 = scalar_lea.vmem %s6, %s397
      %p399 = scmp.lt.s32.totalorder %s19, 1
      %s400 = scalar_select %p399, %s19, 1
      %s401 = smul.addr %s400, 4
      %s402 = scalar_lea.vmem %s7, %s401
      %p403 = scmp.lt.s32.totalorder %s19, 1
      %s404 = scalar_select %p403, %s19, 1
      %s405 = smul.addr %s404, 2
      %s406 = smul.addr %s405, 4
      %s407 = scalar_lea.vmem %s8, %s406
      %v408 = vld [vmem:[%s378] sm:$0xff]
      %v409 = vld [vmem:[%s382] sm:$0xff]
      %v411 = vcombine.high %v408, %v408
      %vm412 = vcmask 31744
      %v414 = vsel %vm412, %v409, 0
      %vm416 = vcmask 1043456
      %v417 = vsel %vm416, %v408, 0
      %v419 = vsel %vm416, %v411, 0
      %421 = vmatprep.subr.mxu0 0.0
      %422 = vmatpush1.msra.mxu0 0.0
      %423 = vmatprep.subr.mxu0 0.0
      %424 = vmatpush1.msra.mxu0 0.0
      %425 = vmatprep.subr.mxu0 0.0
      %426 = vmatpush1.msra.mxu0 0.0
      %427 = vmatprep.subr.mxu0 0.0
      %428 = vmatpush1.msra.mxu0 0.0
      %429 = vmatprep.subr.mxu0 0.0
      %430 = vmatpush1.msra.mxu0 0.0
      %431 = vmatprep.subr.mxu0 0.0
      %432 = vmatpush1.msra.mxu0 0.0
      %433 = vmatprep.subr.mxu0 0.0
      %434 = vmatpush1.msra.mxu0 0.0
      %435 = vmatprep.subr.mxu0 0.0
      %436 = vmatpush1.msra.mxu0 0.0
      %437 = vmatprep.subr.mxu0 0.0
      %438 = vmatpush1.msra.mxu0 0.0
      %439 = vmatprep.subr.mxu0 0.0
      %440 = vmatpush1.msra.mxu0 0.0
      %441 = vmatprep.subr.mxu0 0.0
      %442 = vmatpush1.msra.mxu0 0.0
      %443 = vmatprep.subr.mxu0 0.0
      %444 = vmatpush1.msra.mxu0 0.0
      %445 = vmatprep.subr.mxu0 0.0
      %446 = vmatpush1.msra.mxu0 0.0
      %447 = vmatprep.subr.mxu0 0.0
      %448 = vmatpush1.msra.mxu0 0.0
      %449 = vmatprep.subr.mxu0 0.0
      %450 = vmatpush1.msra.mxu0 0.0
      %451 = vmatprep.subr.mxu0 %v419
      %452 = vmatpush1.msra.mxu0 %v417
      %453 = vmatprep.subr.mxu0 0.0
      %454 = vmatpush2.msra.mxu0 0.0
      %455 = vmatprep.subr.mxu0 0.0
      %456 = vmatpush2.msra.mxu0 0.0
      %457 = vmatprep.subr.mxu0 0.0
      %458 = vmatpush2.msra.mxu0 0.0
      %459 = vmatprep.subr.mxu0 0.0
      %460 = vmatpush2.msra.mxu0 0.0
      %461 = vmatprep.subr.mxu0 0.0
      %462 = vmatpush2.msra.mxu0 0.0
      %463 = vmatprep.subr.mxu0 0.0
      %464 = vmatpush2.msra.mxu0 0.0
      %465 = vmatprep.subr.mxu0 0.0
      %466 = vmatpush2.msra.mxu0 0.0
      %467 = vmatprep.subr.mxu0 0.0
      %468 = vmatpush2.msra.mxu0 0.0
      %469 = vmatprep.subr.mxu0 0.0
      %470 = vmatpush2.msra.mxu0 0.0
      %471 = vmatprep.subr.mxu0 0.0
      %472 = vmatpush2.msra.mxu0 0.0
      %473 = vmatprep.subr.mxu0 0.0
      %474 = vmatpush2.msra.mxu0 0.0
      %475 = vmatprep.subr.mxu0 0.0
      %476 = vmatpush2.msra.mxu0 0.0
      %477 = vmatprep.subr.mxu0 0.0
      %478 = vmatpush2.msra.mxu0 0.0
      %479 = vmatprep.subr.mxu0 0.0
      %480 = vmatpush2.msra.mxu0 0.0
      %481 = vmatprep.subr.mxu0 0.0
      %482 = vmatpush2.msra.mxu0 0.0
      %483 = vmatprep.subr.mxu0 0.0
      %484 = vmatpush2.msra.mxu0 0.0
      %485 = vmatprep.mubr.f32.mxu0 0.0
      %486 = vmatmul.mubr.f32.gmra.mxu0 %v414
      %v487 = vpop.f32.mrf.mxu0
      %v488 = vadd.f32 0.0, %v487
      %v489 = vpop.f32.mrf.mxu0
      %v490 = vadd.f32 0.0, %v489
      %491 = vdwg.mxu0
      %v492 = vld [vmem:[%s386] sm:$0xff]
      %v493 = vadd.f32 %v488, %v490
      %494 = vadd.xlane.f32.xlu0 %v493
      %v495 = vpop.xlane.xlu0 %494
      %v496 = vmul.f32 %v495, 0.00390625
      %v497 = vmul.f32 %v488, %v488
      %v498 = vmul.f32 %v490, %v490
      %v499 = vadd.f32 %v497, %v498
      %500 = vadd.xlane.f32.xlu0 %v499
      %v501 = vpop.xlane.xlu0 %500
      %v502 = vmul.f32 %v501, 0.00390625
      %v503 = vmul.f32 %v496, %v496
      %v504 = vsub.f32 %v502, %v503
      %v505 = vmax.f32 %v504, 0.0
      %v506 = vadd.f32 %v505, 1e-05
      %v507 = vrsqrt.pop %v506
      %v508 = vmul.f32 %v492, %v507
      %v509 = vmul.f32 %v496, %v508
      %511 = vrot.lane.b32.xlu0 %v509, 1
      %v512 = vpop.permute.xlu0 %511
      %v514 = vsub.f32 %v492, %v512
      %516 = vset.pattern.permute.xlu0 0
      %517 = vperm.xlu0 %516, %v508
      %v518 = vpop.permute.xlu0 %517
      %v520 = vmul.f32 %v488, %v518
      %v521 = vmul.f32 %v490, %v518
      %523 = vset.pattern.permute.xlu0 1
      %524 = vperm.xlu0 %523, %v514
      %v525 = vpop.permute.xlu0 %524
      %v527 = vadd.f32 %v520, %v525
      %v528 = vadd.f32 %v521, %v525
      %v529 = vmax.f32 %v527, 0.0
      %v530 = vmax.f32 %v528, 0.0
      %v531 = vld [vmem:[%s4] sm:$0xff]
      %v532 = vld [vmem:[%s4 + $0x8] sm:$0xff]
      %v533 = vld [vmem:[%s4 + $0x10] sm:$0x1]
      %v534 = vld [vmem:[%s4 + $0x18] sm:$0x1]
      %535 = vrot.lane.b32.xlu0 %v529, 34
      %v536 = vpop.permute.xlu0 %535
      %537 = vrot.lane.b32.xlu0 %v530, 34
      %v538 = vpop.permute.xlu0 %537
      %v539 = vlaneseq
      %v540 = vand.u32 %v539, 127
      %vm541 = vcmp.lt.s32.totalorder %v540, 34
      %v542 = vsel %vm541, %v536, %v538
      %v543 = vsel %vm541, %v538, %v536
      %v544 = vlaneseq
      %v545 = vshrl.u32 %v544, 7
      %v546 = vsub.s32 0, %v545
      %v547 = vrot.slane %v531, %v546
      %v548 = vlaneseq
      %v549 = vshrl.u32 %v548, 7
      %v550 = vsub.s32 0, %v549
      %v551 = vrot.slane %v532, %v550
      %v552 = vmul.f32 %v543, %v547
      %v553 = vmul.f32 %v542, %v551
      %554 = vrot.lane.b32.xlu0 %v529, 32
      %v555 = vpop.permute.xlu0 %554
      %556 = vrot.lane.b32.xlu0 %v530, 32
      %v557 = vpop.permute.xlu0 %556
      %vm558 = vcmp.lt.s32.totalorder %v540, 32
      %v559 = vsel %vm558, %v555, %v557
      %v560 = vsel %vm558, %v557, %v555
      %v561 = vlaneseq
      %v562 = vshrl.u32 %v561, 7
      %v563 = vsub.s32 1, %v562
      %v564 = vrot.slane %v531, %v563
      %v565 = vlaneseq
      %v566 = vshrl.u32 %v565, 7
      %v567 = vsub.s32 1, %v566
      %v568 = vrot.slane %v532, %v567
      %v569 = vmul.f32 %v560, %v564
      %v570 = vmul.f32 %v559, %v568
      %571 = vrot.lane.b32.xlu0 %v529, 30
      %v572 = vpop.permute.xlu0 %571
      %573 = vrot.lane.b32.xlu0 %v530, 30
      %v574 = vpop.permute.xlu0 %573
      %vm575 = vcmp.lt.s32.totalorder %v540, 30
      %v576 = vsel %vm575, %v572, %v574
      %v577 = vsel %vm575, %v574, %v572
      %v578 = vlaneseq
      %v579 = vshrl.u32 %v578, 7
      %v580 = vsub.s32 2, %v579
      %v581 = vrot.slane %v531, %v580
      %v582 = vlaneseq
      %v583 = vshrl.u32 %v582, 7
      %v584 = vsub.s32 2, %v583
      %v585 = vrot.slane %v532, %v584
      %v586 = vmul.f32 %v577, %v581
      %v587 = vmul.f32 %v576, %v585
      %588 = vrot.lane.b32.xlu0 %v529, 2
      %v589 = vpop.permute.xlu0 %588
      %590 = vrot.lane.b32.xlu0 %v530, 2
      %v591 = vpop.permute.xlu0 %590
      %vm592 = vcmp.lt.s32.totalorder %v540, 2
      %v593 = vsel %vm592, %v589, %v591
      %v594 = vsel %vm592, %v591, %v589
      %v595 = vlaneseq
      %v596 = vshrl.u32 %v595, 7
      %v597 = vsub.s32 3, %v596
      %v598 = vrot.slane %v531, %v597
      %v599 = vlaneseq
      %v600 = vshrl.u32 %v599, 7
      %v601 = vsub.s32 3, %v600
      %v602 = vrot.slane %v532, %v601
      %v603 = vmul.f32 %v594, %v598
      %v604 = vmul.f32 %v593, %v602
      %605 = vrot.lane.b32.xlu0 %v529, 126
      %v606 = vpop.permute.xlu0 %605
      %607 = vrot.lane.b32.xlu0 %v530, 126
      %v608 = vpop.permute.xlu0 %607
      %vm609 = vcmp.lt.s32.totalorder %v540, 126
      %v610 = vsel %vm609, %v606, %v608
      %v611 = vsel %vm609, %v608, %v606
      %v612 = vlaneseq
      %v613 = vshrl.u32 %v612, 7
      %v614 = vsub.s32 5, %v613
      %v615 = vrot.slane %v531, %v614
      %v616 = vlaneseq
      %v617 = vshrl.u32 %v616, 7
      %v618 = vsub.s32 5, %v617
      %v619 = vrot.slane %v532, %v618
      %v620 = vmul.f32 %v610, %v615
      %v621 = vmul.f32 %v611, %v619
      %622 = vrot.lane.b32.xlu0 %v529, 98
      %v623 = vpop.permute.xlu0 %622
      %624 = vrot.lane.b32.xlu0 %v530, 98
      %v625 = vpop.permute.xlu0 %624
      %vm626 = vcmp.lt.s32.totalorder %v540, 98
      %v627 = vsel %vm626, %v623, %v625
      %v628 = vsel %vm626, %v625, %v623
      %v629 = vlaneseq
      %v630 = vshrl.u32 %v629, 7
      %v631 = vsub.s32 6, %v630
      %v632 = vrot.slane %v531, %v631
      %v633 = vlaneseq
      %v634 = vshrl.u32 %v633, 7
      %v635 = vsub.s32 6, %v634
      %v636 = vrot.slane %v532, %v635
      %v637 = vmul.f32 %v627, %v632
      %v638 = vmul.f32 %v628, %v636
      %639 = vrot.lane.b32.xlu0 %v529, 96
      %v640 = vpop.permute.xlu0 %639
      %641 = vrot.lane.b32.xlu0 %v530, 96
      %v642 = vpop.permute.xlu0 %641
      %vm643 = vcmp.lt.s32.totalorder %v540, 96
      %v644 = vsel %vm643, %v640, %v642
      %v645 = vsel %vm643, %v642, %v640
      %v646 = vlaneseq
      %v647 = vshrl.u32 %v646, 7
      %v648 = vsub.s32 7, %v647
      %v649 = vrot.slane %v531, %v648
      %v650 = vlaneseq
      %v651 = vshrl.u32 %v650, 7
      %v652 = vsub.s32 7, %v651
      %v653 = vrot.slane %v532, %v652
      %v654 = vmul.f32 %v644, %v649
      %v655 = vmul.f32 %v645, %v653
      %656 = vrot.lane.b32.xlu0 %v529, 94
      %v657 = vpop.permute.xlu0 %656
      %658 = vrot.lane.b32.xlu0 %v530, 94
      %v659 = vpop.permute.xlu0 %658
      %vm660 = vcmp.lt.s32.totalorder %v540, 94
      %v661 = vsel %vm660, %v657, %v659
      %v662 = vsel %vm660, %v659, %v657
      %v663 = vlaneseq
      %v664 = vshrl.u32 %v663, 7
      %v665 = vsub.s32 0, %v664
      %v666 = vrot.slane %v533, %v665
      %v667 = vlaneseq
      %v668 = vshrl.u32 %v667, 7
      %v669 = vsub.s32 0, %v668
      %v670 = vrot.slane %v534, %v669
      %v671 = vmul.f32 %v661, %v666
      %v672 = vmul.f32 %v662, %v670
      %v675 = vrot.slane %v569, 4
      %v676 = vrot.slane %v570, 4
      %v681 = vrot.slane %v603, 4
      %v682 = vrot.slane %v604, 4
      %v687 = vrot.slane %v620, 4
      %v688 = vrot.slane %v621, 4
      %v693 = vrot.slane %v654, 4
      %v694 = vrot.slane %v655, 4
      %v697 = vsel %vm416, %v552, %v675
      %v698 = vsel %vm416, %v553, %v676
      %v699 = vsel %vm416, %v586, %v681
      %v700 = vsel %vm416, %v587, %v682
      %v701 = vsel %vm416, %v529, %v687
      %v702 = vsel %vm416, %v530, %v688
      %v703 = vsel %vm416, %v637, %v693
      %v704 = vsel %vm416, %v638, %v694
      %v705 = vld [vmem:[%s390] sm:$0xf]
      %vm706 = vcmask 293888
      %v708 = vsel %vm706, %v705, 0
      %v711 = vsel %vm416, %v671, 0
      %v714 = vsel %vm416, %v672, 0
      %716 = vmatprep.subr.mxu0 0.0
      %717 = vmatpush1.msra.mxu0 0.0
      %718 = vmatprep.subr.mxu0 0.0
      %719 = vmatpush1.msra.mxu0 0.0
      %720 = vmatprep.subr.mxu0 0.0
      %721 = vmatpush1.msra.mxu0 0.0
      %722 = vmatprep.subr.mxu0 0.0
      %723 = vmatpush1.msra.mxu0 0.0
      %724 = vmatprep.subr.mxu0 0.0
      %725 = vmatpush1.msra.mxu0 0.0
      %726 = vmatprep.subr.mxu0 0.0
      %727 = vmatpush1.msra.mxu0 0.0
      %728 = vmatprep.subr.mxu0 0.0
      %729 = vmatpush1.msra.mxu0 0.0
      %730 = vmatprep.subr.mxu0 0.0
      %731 = vmatpush1.msra.mxu0 0.0
      %732 = vmatprep.subr.mxu0 0.0
      %733 = vmatpush1.msra.mxu0 0.0
      %734 = vmatprep.subr.mxu0 0.0
      %735 = vmatpush1.msra.mxu0 0.0
      %736 = vmatprep.subr.mxu0 0.0
      %737 = vmatpush1.msra.mxu0 0.0
      %738 = vmatprep.subr.mxu0 %v714
      %739 = vmatpush1.msra.mxu0 %v711
      %740 = vmatprep.subr.mxu0 %v704
      %741 = vmatpush1.msra.mxu0 %v703
      %742 = vmatprep.subr.mxu0 %v702
      %743 = vmatpush1.msra.mxu0 %v701
      %744 = vmatprep.subr.mxu0 %v700
      %745 = vmatpush1.msra.mxu0 %v699
      %746 = vmatprep.subr.mxu0 %v698
      %747 = vmatpush1.msra.mxu0 %v697
      %748 = vmatprep.subr.mxu0 0.0
      %749 = vmatpush2.msra.mxu0 0.0
      %750 = vmatprep.subr.mxu0 0.0
      %751 = vmatpush2.msra.mxu0 0.0
      %752 = vmatprep.subr.mxu0 0.0
      %753 = vmatpush2.msra.mxu0 0.0
      %754 = vmatprep.subr.mxu0 0.0
      %755 = vmatpush2.msra.mxu0 0.0
      %756 = vmatprep.subr.mxu0 0.0
      %757 = vmatpush2.msra.mxu0 0.0
      %758 = vmatprep.subr.mxu0 0.0
      %759 = vmatpush2.msra.mxu0 0.0
      %760 = vmatprep.subr.mxu0 0.0
      %761 = vmatpush2.msra.mxu0 0.0
      %762 = vmatprep.subr.mxu0 0.0
      %763 = vmatpush2.msra.mxu0 0.0
      %764 = vmatprep.subr.mxu0 0.0
      %765 = vmatpush2.msra.mxu0 0.0
      %766 = vmatprep.subr.mxu0 0.0
      %767 = vmatpush2.msra.mxu0 0.0
      %768 = vmatprep.subr.mxu0 0.0
      %769 = vmatpush2.msra.mxu0 0.0
      %770 = vmatprep.subr.mxu0 0.0
      %771 = vmatpush2.msra.mxu0 0.0
      %772 = vmatprep.subr.mxu0 0.0
      %773 = vmatpush2.msra.mxu0 0.0
      %774 = vmatprep.subr.mxu0 0.0
      %775 = vmatpush2.msra.mxu0 0.0
      %776 = vmatprep.subr.mxu0 0.0
      %777 = vmatpush2.msra.mxu0 0.0
      %778 = vmatprep.subr.mxu0 0.0
      %779 = vmatpush2.msra.mxu0 0.0
      %780 = vmatprep.mubr.f32.mxu0 0.0
      %781 = vmatmul.mubr.f32.gmra.mxu0 %v708
      %v782 = vpop.f32.mrf.mxu0
      %v783 = vadd.f32 0.0, %v782
      %v784 = vpop.f32.mrf.mxu0
      %v785 = vadd.f32 0.0, %v784
      %786 = vdwg.mxu0
      %v787 = vld [vmem:[%s394] sm:$0xf]
      %v788 = vsel %vm416, %v783, 0.0
      %v789 = vsel %vm416, %v785, 0.0
      %v790 = vadd.f32 %v788, %v789
      %791 = vadd.xlane.f32.xlu0 %v790
      %v792 = vpop.xlane.xlu0 %791
      %v793 = vmul.f32 %v792, 0.00390625
      %v794 = vmul.f32 %v783, %v783
      %v795 = vmul.f32 %v785, %v785
      %v796 = vsel %vm416, %v794, 0.0
      %v797 = vsel %vm416, %v795, 0.0
      %v798 = vadd.f32 %v796, %v797
      %799 = vadd.xlane.f32.xlu0 %v798
      %v800 = vpop.xlane.xlu0 %799
      %v801 = vmul.f32 %v800, 0.00390625
      %v802 = vmul.f32 %v793, %v793
      %v803 = vsub.f32 %v801, %v802
      %v804 = vmax.f32 %v803, 0.0
      %v805 = vadd.f32 %v804, 1e-05
      %v806 = vrsqrt.pop %v805
      %v807 = vmul.f32 %v787, %v806
      %v808 = vmul.f32 %v793, %v807
      %810 = vrot.lane.b32.xlu0 %v808, 1
      %v811 = vpop.permute.xlu0 %810
      %v813 = vsub.f32 %v787, %v811
      %815 = vset.pattern.permute.xlu0 0
      %816 = vperm.xlu0 %815, %v807
      %v817 = vpop.permute.xlu0 %816
      %v819 = vmul.f32 %v783, %v817
      %v820 = vmul.f32 %v785, %v817
      %822 = vset.pattern.permute.xlu0 1
      %823 = vperm.xlu0 %822, %v813
      %v824 = vpop.permute.xlu0 %823
      %v826 = vadd.f32 %v819, %v824
      %v827 = vadd.f32 %v820, %v824
      %v828 = vmax.f32 %v826, 0.0
      %v829 = vmax.f32 %v827, 0.0
      %v830 = vsel %vm416, %v828, %v529
      %v831 = vsel %vm416, %v829, %v530
      %v832 = vld [vmem:[%s398] sm:$0xf]
      %vm833 = vcmask 64512
      %v835 = vsel %vm833, %v832, 0
      %837 = vmatprep.subr.mxu0 0.0
      %838 = vmatpush1.msra.mxu0 0.0
      %839 = vmatprep.subr.mxu0 0.0
      %840 = vmatpush1.msra.mxu0 0.0
      %841 = vmatprep.subr.mxu0 0.0
      %842 = vmatpush1.msra.mxu0 0.0
      %843 = vmatprep.subr.mxu0 0.0
      %844 = vmatpush1.msra.mxu0 0.0
      %845 = vmatprep.subr.mxu0 0.0
      %846 = vmatpush1.msra.mxu0 0.0
      %847 = vmatprep.subr.mxu0 0.0
      %848 = vmatpush1.msra.mxu0 0.0
      %849 = vmatprep.subr.mxu0 0.0
      %850 = vmatpush1.msra.mxu0 0.0
      %851 = vmatprep.subr.mxu0 0.0
      %852 = vmatpush1.msra.mxu0 0.0
      %853 = vmatprep.subr.mxu0 0.0
      %854 = vmatpush1.msra.mxu0 0.0
      %855 = vmatprep.subr.mxu0 0.0
      %856 = vmatpush1.msra.mxu0 0.0
      %857 = vmatprep.subr.mxu0 0.0
      %858 = vmatpush1.msra.mxu0 0.0
      %859 = vmatprep.subr.mxu0 0.0
      %860 = vmatpush1.msra.mxu0 0.0
      %861 = vmatprep.subr.mxu0 0.0
      %862 = vmatpush1.msra.mxu0 0.0
      %863 = vmatprep.subr.mxu0 0.0
      %864 = vmatpush1.msra.mxu0 0.0
      %865 = vmatprep.subr.mxu0 0.0
      %866 = vmatpush1.msra.mxu0 0.0
      %867 = vmatprep.subr.mxu0 %v831
      %868 = vmatpush1.msra.mxu0 %v830
      %869 = vmatprep.subr.mxu0 0.0
      %870 = vmatpush2.msra.mxu0 0.0
      %871 = vmatprep.subr.mxu0 0.0
      %872 = vmatpush2.msra.mxu0 0.0
      %873 = vmatprep.subr.mxu0 0.0
      %874 = vmatpush2.msra.mxu0 0.0
      %875 = vmatprep.subr.mxu0 0.0
      %876 = vmatpush2.msra.mxu0 0.0
      %877 = vmatprep.subr.mxu0 0.0
      %878 = vmatpush2.msra.mxu0 0.0
      %879 = vmatprep.subr.mxu0 0.0
      %880 = vmatpush2.msra.mxu0 0.0
      %881 = vmatprep.subr.mxu0 0.0
      %882 = vmatpush2.msra.mxu0 0.0
      %883 = vmatprep.subr.mxu0 0.0
      %884 = vmatpush2.msra.mxu0 0.0
      %885 = vmatprep.subr.mxu0 0.0
      %886 = vmatpush2.msra.mxu0 0.0
      %887 = vmatprep.subr.mxu0 0.0
      %888 = vmatpush2.msra.mxu0 0.0
      %889 = vmatprep.subr.mxu0 0.0
      %890 = vmatpush2.msra.mxu0 0.0
      %891 = vmatprep.subr.mxu0 0.0
      %892 = vmatpush2.msra.mxu0 0.0
      %893 = vmatprep.subr.mxu0 0.0
      %894 = vmatpush2.msra.mxu0 0.0
      %895 = vmatprep.subr.mxu0 0.0
      %896 = vmatpush2.msra.mxu0 0.0
      %897 = vmatprep.subr.mxu0 0.0
      %898 = vmatpush2.msra.mxu0 0.0
      %899 = vmatprep.subr.mxu0 0.0
      %900 = vmatpush2.msra.mxu0 0.0
      %901 = vmatprep.mubr.f32.mxu0 0.0
      %902 = vmatmul.mubr.f32.gmra.mxu0 %v835
      %v903 = vpop.f32.mrf.mxu0
      %v904 = vadd.f32 0.0, %v903
      %v905 = vpop.f32.mrf.mxu0
      %v906 = vadd.f32 0.0, %v905
      %907 = vdwg.mxu0
      %v908 = vld [vmem:[%s402] sm:$0xf]
      %v909 = vsel %vm416, %v904, 0.0
      %v910 = vsel %vm416, %v906, 0.0
      %v911 = vadd.f32 %v909, %v910
      %912 = vadd.xlane.f32.xlu0 %v911
      %v913 = vpop.xlane.xlu0 %912
      %v914 = vmul.f32 %v913, 0.00390625
      %v915 = vmul.f32 %v904, %v904
      %v916 = vmul.f32 %v906, %v906
      %v917 = vsel %vm416, %v915, 0.0
      %v918 = vsel %vm416, %v916, 0.0
      %v919 = vadd.f32 %v917, %v918
      %920 = vadd.xlane.f32.xlu0 %v919
      %v921 = vpop.xlane.xlu0 %920
      %v922 = vmul.f32 %v921, 0.00390625
      %v923 = vmul.f32 %v914, %v914
      %v924 = vsub.f32 %v922, %v923
      %v925 = vmax.f32 %v924, 0.0
      %v926 = vadd.f32 %v925, 1e-05
      %v927 = vrsqrt.pop %v926
      %v928 = vmul.f32 %v908, %v927
      %v929 = vmul.f32 %v914, %v928
      %931 = vrot.lane.b32.xlu0 %v929, 1
      %v932 = vpop.permute.xlu0 %931
      %v934 = vsub.f32 %v908, %v932
      %936 = vset.pattern.permute.xlu0 0
      %937 = vperm.xlu0 %936, %v928
      %v938 = vpop.permute.xlu0 %937
      %v940 = vmul.f32 %v904, %v938
      %v941 = vmul.f32 %v906, %v938
      %943 = vset.pattern.permute.xlu0 1
      %944 = vperm.xlu0 %943, %v934
      %v945 = vpop.permute.xlu0 %944
      %v947 = vadd.f32 %v940, %v945
      %v948 = vadd.f32 %v941, %v945
      %v951 = vcombine.low %v947, %v948
      %953 = vst [vmem:[%s407] sm:$0xff] %v951
      %p954 = scmp.lt.s32.totalorder %s19, 1
      %s955 = scalar_select %p954, %s19, 1
      %s956 = smul.addr %s955, 2
      %s957 = smul.addr %s956, 4
      %s958 = scalar_lea.vmem %s8, %s957
      // Predicated region
      $region53: #{bottle2neck_forward.1} parent=51 // pred_check
        %p959 = pneg %p240
      $region54: #{bottle2neck_forward.1} parent=51 // pred_check_branch
        %961 = sbr.rel (%p959) target = $region56
      $region55: #{bottle2neck_forward.1} parent=51 // pred_region
        _
      $region56: #{bottle2neck_forward.1} parent=51 // pred_fallthru
        _
    $region52: #{bottle2neck_forward.1} parent=5 // pred_fallthru
      _
    %p962 = scmp.le.s32.totalorder 2, %s14
    // Predicated region
    $region57: #{bottle2neck_forward.1} parent=5 // pred_check
      %p963 = pneg %p962
    $region58: #{bottle2neck_forward.1} parent=5 // pred_check_branch
      %965 = sbr.rel (%p963) target = $region60
    $region59: #{bottle2neck_forward.1} parent=5 // pred_region
      %s966 = ssub.s32 %s14, 2
      // Predicated region
      $region61: #{bottle2neck_forward.1} parent=59 // pred_check
        %p967 = pneg %p246
      $region62: #{bottle2neck_forward.1} parent=59 // pred_check_branch
        %969 = sbr.rel (%p967) target = $region64
      $region63: #{bottle2neck_forward.1} parent=59 // pred_region
        %p970 = scmp.lt.s32.totalorder %s20, 1
        %s971 = scalar_select %p970, %s20, 1
        %s972 = smul.addr %s971, 2
        %s973 = smul.addr %s972, 4
        %s974 = scalar_lea.vmem %s8, %s973
      $region64: #{bottle2neck_forward.1} parent=59 // pred_fallthru
        _
    $region60: #{bottle2neck_forward.1} parent=5 // pred_fallthru
      _
  $region6: #{bottle2neck_forward.1} parent=0 // loop_footer
    %s18 = sadd.s32 1, %s14
  $region7: #{bottle2neck_forward.1} parent=0 // loop_footer_branch
    %13 = sbr.rel target = $region3
  $region8: #{bottle2neck_forward.1} parent=0 // loop_exit
    _

</llo_original>
